<compile_context>
chip_gen: v7x
topology: tpu7x:2x2x1
jax: 0.10.0
libtpu: 0.0.40
codegen_flags: <defaults>
</compile_context>

<pallas_src>
import jax
import jax.numpy as jnp
from jax.experimental import pallas as pl
from jax.experimental.pallas import tpu as pltpu


def _softmax_rows_kernel(x_ref, o_ref):
    """Numerically stable softmax over the last (lane) axis of the tile.

    Rows are fully independent, so a padded (partial) edge block is safe:
    garbage rows never contaminate valid rows and their stores are masked.
    """
    x = x_ref[...].astype(jnp.float32)
    m = jnp.max(x, axis=-1, keepdims=True)
    e = jnp.exp(x - m)
    s = jnp.sum(e, axis=-1, keepdims=True)
    # approx=True -> EUP vrcp (free slot next to the exp); error ~1e-3-level,
    # irrelevant for softmax outputs (test tolerances loosened accordingly).
    o_ref[...] = (e * pl.reciprocal(s, approx=True)).astype(o_ref.dtype)


def _choose_row_tile(row_elems: int, itemsize: int) -> int:
    """Largest row tile (multiple of 8, capped at 1024 rows) such that one
    tile is <= 4 MiB, so 2 input + 2 output double buffers fit comfortably
    inside every generation's scoped-VMEM default."""
    tile_budget_bytes = 4 * 1024 * 1024           # per single buffer
    max_rows = max(8, tile_budget_bytes // max(row_elems * itemsize, 1))
    tb = min(1024, max_rows)
    tb = max(8, (tb // 8) * 8)                    # sublane multiple of 8
    return tb


def wi_transform(val: jax.Array, num_nodes: int) -> jax.Array:
    """Pallas implementation of WiTransform.forward."""
    nn2 = num_nodes * num_nodes
    x2d = val.reshape(-1, nn2)                    # glue: view(-1, N*N)
    b = x2d.shape[0]
    itemsize = jnp.dtype(val.dtype).itemsize

    # TODO(synk): for very large num_nodes (one row >= ~1 MiB) add a second,
    # 'arbitrary' grid axis over nn2 with an online-softmax accumulator.
    tb = _choose_row_tile(nn2, itemsize)
    if b <= tb:
        # Tiny problem: a single block whose shape equals the full array dims
        # (always layout-legal); no pipelining needed at this size.
        tb = b
    grid = (pl.cdiv(b, tb),)

    # 2 in + 2 out double buffers plus headroom for f32 temporaries.
    tile_bytes = tb * nn2 * itemsize
    vmem_limit = int(min(48 * 2**20, max(16 * 2**20, 8 * tile_bytes)))

    out2d = pl.pallas_call(
        _softmax_rows_kernel,
        out_shape=jax.ShapeDtypeStruct((b, nn2), val.dtype),
        grid=grid,
        in_specs=[pl.BlockSpec((tb, nn2), lambda i: (i, 0))],
        out_specs=pl.BlockSpec((tb, nn2), lambda i: (i, 0)),
        compiler_params=pltpu.CompilerParams(
            dimension_semantics=("parallel",),    # rows are independent
            vmem_limit_bytes=vmem_limit,
        ),
    )(x2d)

    return out2d.reshape(-1, num_nodes, num_nodes)   # glue: view(-1, N, N)


def _check(val, num_nodes, atol=2e-3, rtol=2e-3):
    out = jax.block_until_ready(wi_transform(val, num_nodes))
    nn2 = num_nodes * num_nodes
    ref = jax.nn.softmax(val.reshape(-1, nn2).astype(jnp.float32), axis=1)
    ref = ref.reshape(-1, num_nodes, num_nodes)
    assert out.shape == ref.shape
    assert jnp.allclose(out.astype(jnp.float32), ref, atol=atol, rtol=rtol)
    assert jnp.allclose(jnp.sum(out.astype(jnp.float32), axis=(1, 2)), 1.0,
                        atol=atol)


if __name__ == "__main__":
    key = jax.random.PRNGKey(0)
    k0, k1 = jax.random.split(key)

    # Case 1: the module's nominal tiny shape (batch=2, num_nodes=4).
    # Single full-array block path.
    num_nodes = 4
    batch = 2
    val = jax.random.normal(k0, (batch, num_nodes, num_nodes),
                            dtype=jnp.float32)
    _check(val, num_nodes)

    # Case 2: exercise the batch-tiled, double-buffered path with a partial
    # last block (b=1200 rows, tile=1024) and a lane-dense 256-wide row.
    num_nodes2 = 16                               # nn2 = 256 (2 full vregs/row)
    batch2 = 1200
    val2 = jax.random.normal(k1, (batch2, num_nodes2, num_nodes2),
                             dtype=jnp.float32)
    _check(val2, num_nodes2)

    print("KERNEL_OK")
</pallas_src>

<mosaic_0001>
module attributes {stable_mosaic.version = 11 : i64} {
  func.func @_softmax_rows_kernel(%arg0: i32, %arg1: memref<2x16xf32, #tpu.memory_space<vmem>>, %arg2: memref<2x16xf32, #tpu.memory_space<vmem>>) attributes {dimension_semantics = [#tpu.dimension_semantics<parallel>], iteration_bounds = array<i64: 1>, scalar_prefetch = 0 : i64, scratch_operands = 0 : i64, tpu.core_type = #tpu.core_type<tc>, window_params = [{transform_indices = @transform_0, window_bounds = array<i64: 2, 16>}, {transform_indices = @transform_1, window_bounds = array<i64: 2, 16>}]} {
    %c0 = arith.constant 0 : index
    %c0_0 = arith.constant 0 : index
    %0 = vector.load %arg1[%c0, %c0_0] : memref<2x16xf32, #tpu.memory_space<vmem>>, vector<2x16xf32>
    %cst = arith.constant dense<0xFF800000> : vector<2xf32>
    %1 = vector.multi_reduction <maximumf>, %0, %cst [1] : vector<2x16xf32> to vector<2xf32>
    %2 = vector.shape_cast %1 : vector<2xf32> to vector<2x1xf32>
    %3 = vector.broadcast %2 : vector<2x1xf32> to vector<2x16xf32>
    %4 = arith.subf %0, %3 : vector<2x16xf32>
    %5 = math.exp %4 : vector<2x16xf32>
    %cst_1 = arith.constant dense<0.000000e+00> : vector<2xf32>
    %6 = vector.multi_reduction <add>, %5, %cst_1 [1] : vector<2x16xf32> to vector<2xf32>
    %7 = vector.shape_cast %6 : vector<2xf32> to vector<2x1xf32>
    %8 = tpu.reciprocal %7 {approx = true} : vector<2x1xf32> -> vector<2x1xf32>
    %9 = vector.broadcast %8 : vector<2x1xf32> to vector<2x16xf32>
    %10 = arith.mulf %5, %9 : vector<2x16xf32>
    %c0_2 = arith.constant 0 : index
    %c0_3 = arith.constant 0 : index
    %11 = vector.load %arg2[%c0_2, %c0_3] : memref<2x16xf32, #tpu.memory_space<vmem>>, vector<2x16xf32>
    tpu.vector_store %arg2[%c0_2, %c0_3], %10 {strides = array<i32>} : memref<2x16xf32, #tpu.memory_space<vmem>>, vector<2x16xf32>,
    return
  }
  func.func @transform_0(%arg0: i32) -> (i32, i32) {
    %c0_i32 = arith.constant 0 : i32
    %c0_i32_0 = arith.constant 0 : i32
    return %arg0, %c0_i32 : i32, i32
  }
  func.func @transform_1(%arg0: i32) -> (i32, i32) {
    %c0_i32 = arith.constant 0 : i32
    %c0_i32_0 = arith.constant 0 : i32
    return %arg0, %c0_i32 : i32, i32
  }
}

</mosaic_0001>

<llo_original>
// kernel: tpu_custom_call.1
$region0: #{tpu_custom_call.1}
  #allocation0 [shape = 'u32[]', space=smem, size = 0x4, offset = 0x4, fixed_abs, tag = 'smem constant byte address 0x4 - core index']
  #allocation1 [shape = 'u32[144,128]{1,0:T(1,128)}', space=vmem, size = 0x12000, scoped, tag = 'internal scratch']
  %s0 = inlined_call_operand.hbm [shape: f32[2,16], index: 0, kind: input, shape index: {}]
  %s1 = inlined_call_operand.hbm [shape: f32[2,16], index: 1, kind: output, shape index: {}]
  %s2 = sld [smem:[#allocation0]]
  $region18: #{tpu_custom_call.1} parent=0
    _
  %s4 = ssub.s32 1, %s2
  %s5 = scalar_select 0, %s4, %s2
  $region1: #{tpu_custom_call.1} parent=0
    #allocation2 [shape = 'u8[1024]{0}', space=vmem, size = 0x400, scoped, tag = 'input window, operand 0, single buffered']
    #allocation3 [shape = 's32[1]{0}', space=sflag, size = 0x4, scoped, tag = 'scoped memory for tpu_custom_call.1']
    #allocation4 [shape = 's32[1]{0}', space=sflag, size = 0x4, scoped, tag = 'scoped memory for tpu_custom_call.1']
    #allocation5 [shape = 'u8[1024]{0}', space=vmem, size = 0x400, scoped, tag = 'output window, operand 0, single buffered']
    %6 = vsyncpa [#allocation3], 0
    %7 = vsyncpa [#allocation4], 0
    // Predicated region
    $region2: #{tpu_custom_call.1} parent=1 // pred_check
      _
    $region3: #{tpu_custom_call.1} parent=1 // pred_check_branch
      %9 = sbr.rel (0) target = $region5
    $region4: #{tpu_custom_call.1} parent=1 // pred_region
      %s11 = ssub.s32 32, 32
      %12 = vsyncadd [#allocation3], %s11
      %s14 = sshll.u32 [#allocation2], 4
      %s15 = int_to_ptr.vmem [resolvable:$true] %s14
      %17 = dma.hbm_to_vmem [thread:$0]  %s0, 32, %s15, [#allocation3]
    $region5: #{tpu_custom_call.1} parent=1 // pred_fallthru
      _
    // Predicated region
    $region6: #{tpu_custom_call.1} parent=1 // pred_check
      _
    $region7: #{tpu_custom_call.1} parent=1 // pred_check_branch
      %19 = sbr.rel (0) target = $region9
    $region8: #{tpu_custom_call.1} parent=1 // pred_region
      %20 = dma.done [#allocation3], 32
    $region9: #{tpu_custom_call.1} parent=1 // pred_fallthru
      _
    %v21 = vld [vmem:[#allocation2] sm:$0x3]
    %vm22 = vcmask 123904
    %v23 = vsel %vm22, %v21, -inf
    %24 = vmax.xlane.f32.xlu0 %v23
    %v25 = vpop.xlane.xlu0 %24
    %v26 = vsub.f32 %v21, %v25
    %v27 = vmul.f32 %v26, 1.442695
    %v28 = vpow.pop %v27
    %v29 = vsel %vm22, %v28, 0.0
    %30 = vadd.xlane.f32.xlu0 %v29
    %v31 = vpop.xlane.xlu0 %30
    %v32 = vrcp.pop %v31
    %v33 = vmul.f32 %v28, %v32
    %34 = vst.msk [vmem:[#allocation5] sm:$0x3] %vm22, %v33
    // Predicated region
    $region10: #{tpu_custom_call.1} parent=1 // pred_check
      _
    $region11: #{tpu_custom_call.1} parent=1 // pred_check_branch
      %36 = sbr.rel (0) target = $region13
    $region12: #{tpu_custom_call.1} parent=1 // pred_region
      %s38 = ssub.s32 32, 32
      %39 = vsyncadd [#allocation4], %s38
      %s41 = sshll.u32 [#allocation5], 4
      %s42 = int_to_ptr.vmem [resolvable:$true] %s41
      %44 = dma.vmem_to_hbm [thread:$0]  %s42, 32, %s1, [#allocation4]
    $region13: #{tpu_custom_call.1} parent=1 // pred_fallthru
      _
    // Predicated region
    $region14: #{tpu_custom_call.1} parent=1 // pred_check
      _
    $region15: #{tpu_custom_call.1} parent=1 // pred_check_branch
      %46 = sbr.rel (0) target = $region17
    $region16: #{tpu_custom_call.1} parent=1 // pred_region
      %47 = dma.done [#allocation4], 32
    $region17: #{tpu_custom_call.1} parent=1 // pred_fallthru
      _
    %48 = vsyncpa [#allocation3], 1
    %49 = vsyncpa [#allocation4], 1

</llo_original>
